<compile_context>
chip_gen: v6e
topology: v6e:2x2x1
jax: 0.10.0
libtpu: 0.0.40
codegen_flags: <defaults>
</compile_context>

<pallas_src>
import functools

import jax
import jax.numpy as jnp
from jax.experimental import pallas as pl
from jax.experimental.pallas import tpu as pltpu

_MIB = 1024 * 1024


def _round_up(x, m):
    return (x + m - 1) // m * m


def _tpu_vmem_capacity_bytes():
    """Physical VMEM per core; conservative 64 MiB fallback if query fails."""
    try:
        return int(pltpu.get_tpu_info().vmem_capacity_bytes)
    except Exception:
        return 64 * _MIB


def _default_tiling(vmem_cap):
    """Generation-aware (tile_m, tile_h, vmem_limit_bytes)."""
    if vmem_cap >= 96 * _MIB:          # v5e / v6e: 128 MiB physical VMEM
        return 1024, 512, 104 * _MIB
    else:                              # v7x: 64 MiB physical VMEM per TC
        return 512, 256, 46 * _MIB


def _pick_row_tile(M, tile_m, row_mult):
    """Row tile: MXU/dtype aligned, capped by M, >=2 tiles when M is large."""
    cap = _round_up(M, row_mult)
    if tile_m >= 256:
        tm = _round_up(tile_m, 256)    # full-height MXU passes on v6e/v7x
    else:
        tm = _round_up(tile_m, row_mult)
    tm = min(tm, cap)
    tm = _round_up(tm, row_mult)
    # v7x shards the "parallel" rows axis across 2 TensorCores: make sure it
    # has >=2 tiles whenever M is big enough that a split still yields decent
    # tiles.
    if _round_up(M, tm) // tm == 1 and M >= 512:
        tm = _round_up((M + 1) // 2, row_mult)
    return tm


def _n_mlp_swiglu_kernel(x_ref, wuv_ref, wo_ref, suv_ref, o_ref, acc_ref, *, th):
    """One (row-tile, hidden-chunk) step of the nGPT SwiGLU MLP.

    x_ref   : (tm, d_model)     input rows (resident across hidden chunks)
    wuv_ref : (d_model, 2*th)   [u-cols | v-cols] for this hidden chunk
    wo_ref  : (th, d_model)     output-projection rows for this hidden chunk
    suv_ref : (1, 2*th)         f32 per-channel scale (already * sqrt(d_model))
    o_ref   : (tm, d_model)     output rows (written on last chunk)
    acc_ref : (tm, d_model)     f32 accumulator scratch
    """
    j = pl.program_id(1)
    is_first = j == 0
    is_last = j == pl.num_programs(1) - 1

    x = x_ref[...]      # native dtype feed -> bf16 MXU rate for bf16 inputs

    # Fused u|v projection: one (tm, 2*th) MXU pass, f32 accumulation.
    uv = jnp.dot(x, wuv_ref[...], preferred_element_type=jnp.float32)
    uv = uv * suv_ref[...]                       # post-matmul scale in f32

    u = uv[:, :th]
    v = uv[:, th:]
    h = u * (v * jax.nn.sigmoid(v))              # u * silu(v); VPU/EUP epilogue

    # Partial output projection for this hidden chunk.
    # (h -> weight dtype before the MXU; f32 kept when weights are f32.)
    partial = jnp.dot(h.astype(wo_ref.dtype), wo_ref[...],
                      preferred_element_type=jnp.float32)

    # Combine partials without redundant accumulator read/write passes.
    @pl.when(is_first & jnp.logical_not(is_last))
    def _():
        acc_ref[...] = partial

    @pl.when(jnp.logical_not(is_first) & jnp.logical_not(is_last))
    def _():
        acc_ref[...] = acc_ref[...] + partial

    @pl.when(is_first & is_last)                 # single hidden chunk
    def _():
        o_ref[...] = partial.astype(o_ref.dtype)

    @pl.when(jnp.logical_not(is_first) & is_last)
    def _():
        # Dropout is identity (mlp_dropout = 0).
        o_ref[...] = (acc_ref[...] + partial).astype(o_ref.dtype)


def n_mlp_swiglu(x, w_uv, w_o, s_uv, *, tile_m=None, tile_h=None,
                 vmem_limit_bytes=None):
    """nGPT SwiGLU MLP forward (matches nMLPSwiGLU.forward with dropout=0).

    x    : [batch, seq, d_model]
    w_uv : [2H, d_model]   (torch nn.Linear weight layout)
    w_o  : [d_model, H]    (torch nn.Linear weight layout)
    s_uv : [2H]
    """
    batch, seq, d_model = x.shape
    two_h = w_uv.shape[0]
    hidden = two_h // 2

    # ---- generation-aware tiling / VMEM budget ------------------------------
    vmem_cap = _tpu_vmem_capacity_bytes()
    d_tm, d_th, d_vmem = _default_tiling(vmem_cap)
    tile_m = d_tm if tile_m is None else tile_m
    tile_h = d_th if tile_h is None else tile_h
    vmem_limit_bytes = d_vmem if vmem_limit_bytes is None else vmem_limit_bytes

    # ---- rows axis: flatten + pad to a multiple of the row tile -------------
    itemsize = jnp.dtype(x.dtype).itemsize
    row_mult = max(8, 32 // itemsize)            # 8 f32, 16 bf16, 32 int8/fp8
    M = batch * seq
    tm = _pick_row_tile(M, tile_m, row_mult)
    M_pad = _round_up(M, tm)

    x2d = x.reshape(M, d_model)
    if M_pad != M:
        x2d = jnp.pad(x2d, ((0, M_pad - M), (0, 0)))

    # ---- hidden axis: split fused weight, pre-transpose, pad, re-pack -------
    assert tile_h % 128 == 0, "tile_h must be a multiple of 128"
    th = min(tile_h, _round_up(hidden, 128))
    H_pad = _round_up(hidden, th)
    n_chunks = H_pad // th

    sqrt_d = jnp.float32(d_model) ** 0.5
    # s_uv_init / s_uv_scale == 1.0 in the module; fold sqrt(d) host-side.
    s_u = s_uv[:hidden].astype(jnp.float32) * sqrt_d
    s_v = s_uv[hidden:].astype(jnp.float32) * sqrt_d

    w_u_t = w_uv[:hidden].T                      # (d_model, H)
    w_v_t = w_uv[hidden:].T                      # (d_model, H)
    w_o_t = w_o.T                                # (H, d_model)

    if H_pad != hidden:
        ph = H_pad - hidden
        w_u_t = jnp.pad(w_u_t, ((0, 0), (0, ph)))
        w_v_t = jnp.pad(w_v_t, ((0, 0), (0, ph)))
        w_o_t = jnp.pad(w_o_t, ((0, ph), (0, 0)))
        s_u = jnp.pad(s_u, ((0, ph),))
        s_v = jnp.pad(s_v, ((0, ph),))

    # Pack per-chunk [u-cols | v-cols] so one BlockSpec / DMA / MXU pass covers
    # both halves of the gated projection.
    w_uv_f = jnp.stack(
        [w_u_t.reshape(d_model, n_chunks, th),
         w_v_t.reshape(d_model, n_chunks, th)], axis=2,
    ).reshape(d_model, n_chunks * 2 * th)
    s_uv_f = jnp.stack(
        [s_u.reshape(n_chunks, th), s_v.reshape(n_chunks, th)], axis=1,
    ).reshape(1, n_chunks * 2 * th)

    grid = (M_pad // tm, n_chunks)
    kernel = functools.partial(_n_mlp_swiglu_kernel, th=th)

    out2d = pl.pallas_call(
        kernel,
        out_shape=jax.ShapeDtypeStruct((M_pad, d_model), x.dtype),
        grid_spec=pltpu.PrefetchScalarGridSpec(
            num_scalar_prefetch=0,
            grid=grid,
            in_specs=[
                pl.BlockSpec((tm, d_model), lambda i, j: (i, 0)),      # x rows
                pl.BlockSpec((d_model, 2 * th), lambda i, j: (0, j)),  # [Wu|Wv]
                pl.BlockSpec((th, d_model), lambda i, j: (j, 0)),      # W_o^T
                pl.BlockSpec((1, 2 * th), lambda i, j: (0, j)),        # scale
            ],
            out_specs=pl.BlockSpec((tm, d_model), lambda i, j: (i, 0)),
            scratch_shapes=[pltpu.VMEM((tm, d_model), jnp.float32)],
        ),
        compiler_params=pltpu.CompilerParams(
            dimension_semantics=("parallel", "arbitrary"),
            vmem_limit_bytes=int(vmem_limit_bytes),
        ),
    )(x2d, w_uv_f, w_o_t, s_uv_f)

    return out2d[:M].reshape(batch, seq, d_model)


def n_mlp_swiglu_ref(x, w_uv, w_o, s_uv):
    """Pure-JAX reference matching the PyTorch forward exactly."""
    d_model = x.shape[-1]
    uv = jnp.einsum('bsd,hd->bsh', x, w_uv)                    # Linear, no bias
    suv = s_uv * (1.0 / 1.0 * jnp.sqrt(jnp.float32(d_model)))
    uv = suv * uv
    u, v = jnp.split(uv, 2, axis=-1)
    x_mlp = u * (v * jax.nn.sigmoid(v))                        # u * silu(v)
    return jnp.einsum('bsh,dh->bsd', x_mlp, w_o)               # W_o; dropout=id


if __name__ == "__main__":
    # Config: d_model=128, hidden_dim=None -> 4*d_model=512, mlp_bias=False,
    # mlp_dropout=0.
    batch, seq, d_model = 2, 8, 128
    hidden_dim = 4 * d_model

    key = jax.random.PRNGKey(0)
    kx, kuv, ko = jax.random.split(key, 3)

    x = jax.random.normal(kx, (batch, seq, d_model), dtype=jnp.float32)
    # torch.nn.Linear weight shapes: W_uv.weight [2H, d_model], W_o.weight [d_model, H]
    w_uv = jax.random.normal(kuv, (2 * hidden_dim, d_model), dtype=jnp.float32) * 0.02
    w_o = jax.random.normal(ko, (d_model, hidden_dim), dtype=jnp.float32) * 0.02
    s_uv = jnp.ones((2 * hidden_dim,), dtype=jnp.float32)      # s_uv_scale * ones

    # Small explicit tiles: 2 row tiles x 2 hidden chunks exercises both the
    # parallel rows axis and the accumulator combine path.
    out = n_mlp_swiglu(x, w_uv, w_o, s_uv, tile_m=8, tile_h=256)
    out = jax.block_until_ready(out)

    ref = n_mlp_swiglu_ref(x, w_uv, w_o, s_uv)
    assert out.shape == (batch, seq, d_model)
    assert jnp.allclose(out, ref, atol=2e-4, rtol=2e-4), "mismatch vs reference"

    # Auto (generation-aware) tiling path: single row tile, single/few chunks.
    out2 = jax.block_until_ready(n_mlp_swiglu(x, w_uv, w_o, s_uv))
    assert jnp.allclose(out2, ref, atol=2e-4, rtol=2e-4), "mismatch (auto tiles)"

    print("KERNEL_OK")
</pallas_src>

<mosaic_0001>
module attributes {stable_mosaic.version = 11 : i64} {
  func.func @_n_mlp_swiglu_kernel(%arg0: i32, %arg1: i32, %arg2: memref<8x128xf32, #tpu.memory_space<vmem>>, %arg3: memref<128x512xf32, #tpu.memory_space<vmem>>, %arg4: memref<256x128xf32, #tpu.memory_space<vmem>>, %arg5: memref<1x512xf32, #tpu.memory_space<vmem>>, %arg6: memref<8x128xf32, #tpu.memory_space<vmem>>, %arg7: memref<8x128xf32, #tpu.memory_space<vmem>>) attributes {dimension_semantics = [#tpu.dimension_semantics<parallel>, #tpu.dimension_semantics<arbitrary>], iteration_bounds = array<i64: 2, 2>, scalar_prefetch = 0 : i64, scratch_operands = 1 : i64, tpu.core_type = #tpu.core_type<tc>, window_params = [{transform_indices = @transform_0, window_bounds = array<i64: 8, 128>}, {transform_indices = @transform_1, window_bounds = array<i64: 128, 512>}, {transform_indices = @transform_2, window_bounds = array<i64: 256, 128>}, {transform_indices = @transform_3, window_bounds = array<i64: 1, 512>}, {transform_indices = @transform_4, window_bounds = array<i64: 8, 128>}]} {
    %c0_i32 = arith.constant 0 : i32
    %0 = arith.cmpi eq, %arg1, %c0_i32 : i32
    %c1_i32 = arith.constant 1 : i32
    %1 = arith.cmpi eq, %arg1, %c1_i32 : i32
    %c0 = arith.constant 0 : index
    %c0_0 = arith.constant 0 : index
    %2 = vector.load %arg2[%c0, %c0_0] : memref<8x128xf32, #tpu.memory_space<vmem>>, vector<8x128xf32>
    %c0_1 = arith.constant 0 : index
    %c0_2 = arith.constant 0 : index
    %3 = vector.load %arg3[%c0_1, %c0_2] : memref<128x512xf32, #tpu.memory_space<vmem>>, vector<128x512xf32>
    %cst = arith.constant dense<0.000000e+00> : vector<8x512xf32>
    %4 = tpu.matmul %2, %3, %cst {dimension_numbers = #tpu.dot_dimension_numbers<[1], [0], [0], [1], [0, 0, 1, 1], [], []>} : vector<8x128xf32>, vector<128x512xf32>, vector<8x512xf32> -> vector<8x512xf32>
    %c0_3 = arith.constant 0 : index
    %c0_4 = arith.constant 0 : index
    %5 = vector.load %arg5[%c0_3, %c0_4] : memref<1x512xf32, #tpu.memory_space<vmem>>, vector<1x512xf32>
    %6 = vector.broadcast %5 : vector<1x512xf32> to vector<8x512xf32>
    %7 = arith.mulf %4, %6 : vector<8x512xf32>
    %8 = vector.extract_strided_slice %7 {offsets = [0, 0], sizes = [8, 256], strides = [1, 1]} : vector<8x512xf32> to vector<8x256xf32>
    %9 = vector.extract_strided_slice %7 {offsets = [0, 256], sizes = [8, 256], strides = [1, 1]} : vector<8x512xf32> to vector<8x256xf32>
    %10 = arith.negf %9 : vector<8x256xf32>
    %11 = math.exp %10 : vector<8x256xf32>
    %cst_5 = arith.constant 1.000000e+00 : f32
    %12 = vector.broadcast %cst_5 : f32 to vector<8x256xf32>
    %13 = arith.addf %12, %11 : vector<8x256xf32>
    %14 = arith.divf %12, %13 : vector<8x256xf32>
    %15 = arith.mulf %9, %14 : vector<8x256xf32>
    %16 = arith.mulf %8, %15 : vector<8x256xf32>
    %c0_6 = arith.constant 0 : index
    %c0_7 = arith.constant 0 : index
    %17 = vector.load %arg4[%c0_6, %c0_7] : memref<256x128xf32, #tpu.memory_space<vmem>>, vector<256x128xf32>
    %cst_8 = arith.constant dense<0.000000e+00> : vector<8x128xf32>
    %18 = tpu.matmul %16, %17, %cst_8 {dimension_numbers = #tpu.dot_dimension_numbers<[1], [0], [0], [1], [0, 0, 1, 1], [], []>} : vector<8x256xf32>, vector<256x128xf32>, vector<8x128xf32> -> vector<8x128xf32>
    %true = arith.constant true
    %19 = arith.xori %1, %true : i1
    %20 = arith.andi %0, %19 : i1
    %21 = arith.extui %20 : i1 to i32
    %c0_i32_9 = arith.constant 0 : i32
    %22 = arith.cmpi ne, %21, %c0_i32_9 : i32
    scf.if %22 {
      %c0_16 = arith.constant 0 : index
      %c0_17 = arith.constant 0 : index
      %35 = vector.load %arg7[%c0_16, %c0_17] : memref<8x128xf32, #tpu.memory_space<vmem>>, vector<8x128xf32>
      tpu.vector_store %arg7[%c0_16, %c0_17], %18 {strides = array<i32>} : memref<8x128xf32, #tpu.memory_space<vmem>>, vector<8x128xf32>,
    } else {
    }
    %true_10 = arith.constant true
    %23 = arith.xori %0, %true_10 : i1
    %true_11 = arith.constant true
    %24 = arith.xori %1, %true_11 : i1
    %25 = arith.andi %23, %24 : i1
    %26 = arith.extui %25 : i1 to i32
    %c0_i32_12 = arith.constant 0 : i32
    %27 = arith.cmpi ne, %26, %c0_i32_12 : i32
    scf.if %27 {
      %c0_16 = arith.constant 0 : index
      %c0_17 = arith.constant 0 : index
      %35 = vector.load %arg7[%c0_16, %c0_17] : memref<8x128xf32, #tpu.memory_space<vmem>>, vector<8x128xf32>
      %36 = arith.addf %35, %18 : vector<8x128xf32>
      %c0_18 = arith.constant 0 : index
      %c0_19 = arith.constant 0 : index
      %37 = vector.load %arg7[%c0_18, %c0_19] : memref<8x128xf32, #tpu.memory_space<vmem>>, vector<8x128xf32>
      tpu.vector_store %arg7[%c0_18, %c0_19], %36 {strides = array<i32>} : memref<8x128xf32, #tpu.memory_space<vmem>>, vector<8x128xf32>,
    } else {
    }
    %28 = arith.andi %0, %1 : i1
    %29 = arith.extui %28 : i1 to i32
    %c0_i32_13 = arith.constant 0 : i32
    %30 = arith.cmpi ne, %29, %c0_i32_13 : i32
    scf.if %30 {
      %c0_16 = arith.constant 0 : index
      %c0_17 = arith.constant 0 : index
      %35 = vector.load %arg6[%c0_16, %c0_17] : memref<8x128xf32, #tpu.memory_space<vmem>>, vector<8x128xf32>
      tpu.vector_store %arg6[%c0_16, %c0_17], %18 {strides = array<i32>} : memref<8x128xf32, #tpu.memory_space<vmem>>, vector<8x128xf32>,
    } else {
    }
    %true_14 = arith.constant true
    %31 = arith.xori %0, %true_14 : i1
    %32 = arith.andi %31, %1 : i1
    %33 = arith.extui %32 : i1 to i32
    %c0_i32_15 = arith.constant 0 : i32
    %34 = arith.cmpi ne, %33, %c0_i32_15 : i32
    scf.if %34 {
      %c0_16 = arith.constant 0 : index
      %c0_17 = arith.constant 0 : index
      %35 = vector.load %arg7[%c0_16, %c0_17] : memref<8x128xf32, #tpu.memory_space<vmem>>, vector<8x128xf32>
      %36 = arith.addf %35, %18 : vector<8x128xf32>
      %c0_18 = arith.constant 0 : index
      %c0_19 = arith.constant 0 : index
      %37 = vector.load %arg6[%c0_18, %c0_19] : memref<8x128xf32, #tpu.memory_space<vmem>>, vector<8x128xf32>
      tpu.vector_store %arg6[%c0_18, %c0_19], %36 {strides = array<i32>} : memref<8x128xf32, #tpu.memory_space<vmem>>, vector<8x128xf32>,
    } else {
    }
    return
  }
  func.func @transform_0(%arg0: i32, %arg1: i32) -> (i32, i32) {
    %c0_i32 = arith.constant 0 : i32
    %c0_i32_0 = arith.constant 0 : i32
    return %arg0, %c0_i32 : i32, i32
  }
  func.func @transform_1(%arg0: i32, %arg1: i32) -> (i32, i32) {
    %c0_i32 = arith.constant 0 : i32
    %c0_i32_0 = arith.constant 0 : i32
    return %c0_i32, %arg1 : i32, i32
  }
  func.func @transform_2(%arg0: i32, %arg1: i32) -> (i32, i32) {
    %c0_i32 = arith.constant 0 : i32
    %c0_i32_0 = arith.constant 0 : i32
    return %arg1, %c0_i32 : i32, i32
  }
  func.func @transform_3(%arg0: i32, %arg1: i32) -> (i32, i32) {
    %c0_i32 = arith.constant 0 : i32
    %c0_i32_0 = arith.constant 0 : i32
    return %c0_i32, %arg1 : i32, i32
  }
  func.func @transform_4(%arg0: i32, %arg1: i32) -> (i32, i32) {
    %c0_i32 = arith.constant 0 : i32
    %c0_i32_0 = arith.constant 0 : i32
    return %arg0, %c0_i32 : i32, i32
  }
}

</mosaic_0001>

<llo_original>
// kernel: tpu_custom_call.1
$region0: #{tpu_custom_call.1}
  #allocation0 [shape = 'u32[]', space=smem, size = 0x4, offset = 0x4, fixed_abs, tag = 'smem constant byte address 0x4 - core index']
  #allocation1 [shape = 'u32[144,128]{1,0:T(1,128)}', space=vmem, size = 0x12000, scoped, tag = 'internal scratch']
  #allocation2 [shape = 'f32[8,128]{1,0:T(8,128)}', space=vmem, size = 0x1000, scoped, tag = 'scratch operand']
  %s0 = inlined_call_operand.hbm [shape: f32[16,128], index: 0, kind: input, shape index: {}]
  %s1 = inlined_call_operand.hbm [shape: f32[128,1024], index: 1, kind: input, shape index: {}]
  %s2 = inlined_call_operand.hbm [shape: f32[512,128], index: 2, kind: input, shape index: {}]
  %s3 = inlined_call_operand.hbm [shape: f32[1,1024], index: 3, kind: input, shape index: {}]
  %s4 = inlined_call_operand.hbm [shape: f32[16,128], index: 4, kind: output, shape index: {}]
  %s5 = sld [smem:[#allocation0]]
  $region81: #{tpu_custom_call.1} parent=0
    _
  %s7 = ssub.s32 1, %s5
  %s8 = scalar_select 0, %s7, %s5
  $region1: #{tpu_custom_call.1} parent=0
    #allocation3 [shape = 'u8[8192]{0}', space=vmem, size = 0x2000, scoped, tag = 'input window, operand 0']
    #allocation4 [shape = 's32[2]{0}', space=sflag, size = 0x8, scoped, tag = 'scoped memory for tpu_custom_call.1']
    #allocation5 [shape = 's32[2]{0}', space=sflag, size = 0x8, scoped, tag = 'scoped memory for tpu_custom_call.1']
    #allocation6 [shape = 'u8[524288]{0}', space=vmem, size = 0x80000, scoped, tag = 'input window, operand 1']
    #allocation7 [shape = 's32[2]{0}', space=sflag, size = 0x8, scoped, tag = 'scoped memory for tpu_custom_call.1']
    #allocation8 [shape = 'u8[262144]{0}', space=vmem, size = 0x40000, scoped, tag = 'input window, operand 2']
    #allocation9 [shape = 'u8[4096]{0}', space=vmem, size = 0x1000, scoped, tag = 'input window, operand 3']
    #allocation10 [shape = 's32[2]{0}', space=sflag, size = 0x8, scoped, tag = 'scoped memory for tpu_custom_call.1']
    #allocation11 [shape = 'u8[8192]{0}', space=vmem, size = 0x2000, scoped, tag = 'output window, operand 0']
    %9 = vsyncpa [#allocation4], 0
    %s10 = scalar_lea.sflag [#allocation4], 1
    %11 = vsyncpa %s10, 0
    %12 = vsyncpa [#allocation7], 0
    %s13 = scalar_lea.sflag [#allocation7], 1
    %14 = vsyncpa %s13, 0
    %15 = vsyncpa [#allocation10], 0
    %s16 = scalar_lea.sflag [#allocation10], 1
    %17 = vsyncpa %s16, 0
    %18 = vsyncpa [#allocation5], 0
    %s19 = scalar_lea.sflag [#allocation5], 1
    %20 = vsyncpa %s19, 0
    loop: start=0, step=1, limit=6
    $region2: #{tpu_custom_call.1} parent=1 // loop_pre_header
      _
    $region3: #{tpu_custom_call.1} parent=1 // loop_header
      %s22 = sphi 0, %s26
      %p23 = scmp.ge.s32.totalorder %s22, 6
      %s29 = sphi 0, %s41
      %s30 = sphi 0, %s37
      %s31 = sphi 0, %s29
      %s32 = sphi 0, %s30
      %s33 = sphi 0, %s31
      %s34 = sphi 0, %s32
      %s44 = sphi 0, %s46
      %s47 = sphi 0, %s44
      %s48 = sphi 0, %s47
      %s64 = sphi 0, %s48
      %s70 = sphi 0, %s72
      %s73 = sphi 0, %s70
      %s74 = sphi 0, %s73
      %s90 = sphi 0, %s74
      %s96 = sphi 0, %s98
      %s99 = sphi 0, %s96
      %s100 = sphi 0, %s99
      %s116 = sphi 0, %s100
      %s122 = sphi 0, %s124
      %s125 = sphi 0, %s122
      %s126 = sphi 0, %s125
      %s142 = sphi 0, %s126
      %s148 = sphi 0, %s150
      %s151 = sphi 0, %s148
      %s152 = sphi 0, %s151
      %s168 = sphi 0, %s152
    $region4: #{tpu_custom_call.1} parent=1 // loop_header_branch
      %25 = sbr.rel (%p23) target = $region8
    $region5: #{tpu_custom_call.1} parent=1 // loop_body
      %s27 = ssub.s32 %s22, 1
      %s28 = ssub.s32 %s22, 2
      %s35 = sadd.s32 1, %s30
      %p36 = scmp.ge.s32.totalorder %s35, 2
      %s37 = scalar_select %p36, 0, %s35
      %s38 = sadd.s32 1, %s29
      %s39 = scalar_select %p36, %s38, %s29
      %p40 = scmp.ge.s32.totalorder %s39, 2
      %s41 = scalar_select %p40, 0, %s39
      %s42 = ssub.s32 %s29, %s41
      %p43 = scmp.eq.s32.totalorder %s42, 0
      %s45 = sadd.s32 %s44, 1
      %s46 = scalar_select %p43, %s44, %s45
      %p49 = pneg %p43
      %p50 = scmp.eq.s32.totalorder %s22, 3
      %p51 = por %p49, %p50
      %p52 = scmp.ne.s32.totalorder %s44, %s47
      %p53 = scmp.eq.s32.totalorder %s22, 0
      %p54 = por %p52, %p53
      %p55 = scmp.ne.s32.totalorder %s44, %s47
      %p56 = scmp.eq.s32.totalorder %s27, 3
      %p57 = por %p55, %p56
      %p58 = scmp.ne.s32.totalorder %s47, %s48
      %p59 = scmp.eq.s32.totalorder %s27, 0
      %p60 = por %p58, %p59
      %p61 = scmp.ne.s32.totalorder %s47, %s48
      %p62 = scmp.eq.s32.totalorder %s28, 3
      %p63 = por %p61, %p62
      %p65 = scmp.ne.s32.totalorder %s48, %s64
      %p66 = scmp.eq.s32.totalorder %s28, 0
      %p67 = por %p65, %p66
      %s68 = ssub.s32 %s30, %s37
      %p69 = scmp.eq.s32.totalorder %s68, 0
      %s71 = sadd.s32 %s70, 1
      %s72 = scalar_select %p69, %s70, %s71
      %p75 = pneg %p69
      %p76 = scmp.eq.s32.totalorder %s22, 3
      %p77 = por %p75, %p76
      %p78 = scmp.ne.s32.totalorder %s70, %s73
      %p79 = scmp.eq.s32.totalorder %s22, 0
      %p80 = por %p78, %p79
      %p81 = scmp.ne.s32.totalorder %s70, %s73
      %p82 = scmp.eq.s32.totalorder %s27, 3
      %p83 = por %p81, %p82
      %p84 = scmp.ne.s32.totalorder %s73, %s74
      %p85 = scmp.eq.s32.totalorder %s27, 0
      %p86 = por %p84, %p85
      %p87 = scmp.ne.s32.totalorder %s73, %s74
      %p88 = scmp.eq.s32.totalorder %s28, 3
      %p89 = por %p87, %p88
      %p91 = scmp.ne.s32.totalorder %s74, %s90
      %p92 = scmp.eq.s32.totalorder %s28, 0
      %p93 = por %p91, %p92
      %s94 = ssub.s32 %s30, %s37
      %p95 = scmp.eq.s32.totalorder %s94, 0
      %s97 = sadd.s32 %s96, 1
      %s98 = scalar_select %p95, %s96, %s97
      %p101 = pneg %p95
      %p102 = scmp.eq.s32.totalorder %s22, 3
      %p103 = por %p101, %p102
      %p104 = scmp.ne.s32.totalorder %s96, %s99
      %p105 = scmp.eq.s32.totalorder %s22, 0
      %p106 = por %p104, %p105
      %p107 = scmp.ne.s32.totalorder %s96, %s99
      %p108 = scmp.eq.s32.totalorder %s27, 3
      %p109 = por %p107, %p108
      %p110 = scmp.ne.s32.totalorder %s99, %s100
      %p111 = scmp.eq.s32.totalorder %s27, 0
      %p112 = por %p110, %p111
      %p113 = scmp.ne.s32.totalorder %s99, %s100
      %p114 = scmp.eq.s32.totalorder %s28, 3
      %p115 = por %p113, %p114
      %p117 = scmp.ne.s32.totalorder %s100, %s116
      %p118 = scmp.eq.s32.totalorder %s28, 0
      %p119 = por %p117, %p118
      %s120 = ssub.s32 %s30, %s37
      %p121 = scmp.eq.s32.totalorder %s120, 0
      %s123 = sadd.s32 %s122, 1
      %s124 = scalar_select %p121, %s122, %s123
      %p127 = pneg %p121
      %p128 = scmp.eq.s32.totalorder %s22, 3
      %p129 = por %p127, %p128
      %p130 = scmp.ne.s32.totalorder %s122, %s125
      %p131 = scmp.eq.s32.totalorder %s22, 0
      %p132 = por %p130, %p131
      %p133 = scmp.ne.s32.totalorder %s122, %s125
      %p134 = scmp.eq.s32.totalorder %s27, 3
      %p135 = por %p133, %p134
      %p136 = scmp.ne.s32.totalorder %s125, %s126
      %p137 = scmp.eq.s32.totalorder %s27, 0
      %p138 = por %p136, %p137
      %p139 = scmp.ne.s32.totalorder %s125, %s126
      %p140 = scmp.eq.s32.totalorder %s28, 3
      %p141 = por %p139, %p140
      %p143 = scmp.ne.s32.totalorder %s126, %s142
      %p144 = scmp.eq.s32.totalorder %s28, 0
      %p145 = por %p143, %p144
      %s146 = ssub.s32 %s29, %s41
      %p147 = scmp.eq.s32.totalorder %s146, 0
      %s149 = sadd.s32 %s148, 1
      %s150 = scalar_select %p147, %s148, %s149
      %p153 = pneg %p147
      %p154 = scmp.eq.s32.totalorder %s22, 3
      %p155 = por %p153, %p154
      %p156 = scmp.ne.s32.totalorder %s148, %s151
      %p157 = scmp.eq.s32.totalorder %s22, 0
      %p158 = por %p156, %p157
      %p159 = scmp.ne.s32.totalorder %s148, %s151
      %p160 = scmp.eq.s32.totalorder %s27, 3
      %p161 = por %p159, %p160
      %p162 = scmp.ne.s32.totalorder %s151, %s152
      %p163 = scmp.eq.s32.totalorder %s27, 0
      %p164 = por %p162, %p163
      %p165 = scmp.ne.s32.totalorder %s151, %s152
      %p166 = scmp.eq.s32.totalorder %s28, 3
      %p167 = por %p165, %p166
      %p169 = scmp.ne.s32.totalorder %s152, %s168
      %p170 = scmp.eq.s32.totalorder %s28, 0
      %p171 = por %p169, %p170
      %p172 = scmp.le.s32.totalorder 1, %s22
      %p173 = scmp.lt.s32.totalorder %s22, 5
      %p174 = pnand %p172, %p173
      %p175 = pneg %p174
      // Predicated region
      $region9: #{tpu_custom_call.1} parent=5 // pred_check
        _
      $region10: #{tpu_custom_call.1} parent=5 // pred_check_branch
        %177 = sbr.rel (%p174) target = $region12
      $region11: #{tpu_custom_call.1} parent=5 // pred_region
        %s178 = ssub.s32 %s22, 1
      $region12: #{tpu_custom_call.1} parent=5 // pred_fallthru
        _
      %p179 = scmp.lt.s32.totalorder %s22, 4
      // Predicated region
      $region13: #{tpu_custom_call.1} parent=5 // pred_check
        %p180 = pneg %p179
      $region14: #{tpu_custom_call.1} parent=5 // pred_check_branch
        %182 = sbr.rel (%p180) target = $region16
      $region15: #{tpu_custom_call.1} parent=5 // pred_region
        // Predicated region
        $region17: #{tpu_custom_call.1} parent=15 // pred_check
          %p183 = pneg %p54
        $region18: #{tpu_custom_call.1} parent=15 // pred_check_branch
          %185 = sbr.rel (%p183) target = $region20
        $region19: #{tpu_custom_call.1} parent=15 // pred_region
          %s186 = sand.u32 %s44, 1
          %s187 = scalar_lea.sflag [#allocation4], %s186
          %s188 = sand.u32 %s44, 1
          %s189 = smul.addr %s188, 8
          %s190 = scalar_lea.vmem [#allocation3], %s189
          %s192 = ssub.s32 128, 128
          %193 = vsyncadd %s187, %s192
          %s194 = smul.addr %s29, 128
          %s195 = scalar_lea.hbm %s0, %s194
          %s197 = sshll.u32 %s190, 4
          %s198 = int_to_ptr.vmem [resolvable:$true] %s197
          %200 = dma.hbm_to_vmem [thread:$0]  %s195, 128, %s198, %s187
        $region20: #{tpu_custom_call.1} parent=15 // pred_fallthru
          _
        // Predicated region
        $region21: #{tpu_custom_call.1} parent=15 // pred_check
          %p201 = pneg %p80
        $region22: #{tpu_custom_call.1} parent=15 // pred_check_branch
          %203 = sbr.rel (%p201) target = $region24
        $region23: #{tpu_custom_call.1} parent=15 // pred_region
          %s204 = sand.u32 %s22, 1
          %s205 = scalar_lea.sflag [#allocation7], %s204
          %s206 = sand.u32 %s70, 1
          %s207 = smul.addr %s206, 512
          %s208 = scalar_lea.vmem [#allocation6], %s207
          %s209 = smul.u32 4, %s30
          %s211 = ssub.s32 8192, 8192
          %212 = vsyncadd %s205, %s211
          %s213 = smul.addr %s209, 128
          %s214 = scalar_lea.hbm %s1, %s213
          %s215 = sshll.u32 %s208, 4
          %s216 = int_to_ptr.vmem [resolvable:$true] %s215
          %221 = dma.hbm_to_vmem [thread:$0]  %s214, 8192, %s216, %s205, 1024, 512, 32
        $region24: #{tpu_custom_call.1} parent=15 // pred_fallthru
          _
        // Predicated region
        $region25: #{tpu_custom_call.1} parent=15 // pred_check
          %p222 = pneg %p106
        $region26: #{tpu_custom_call.1} parent=15 // pred_check_branch
          %224 = sbr.rel (%p222) target = $region28
        $region27: #{tpu_custom_call.1} parent=15 // pred_region
          %s225 = sand.u32 %s22, 1
          %s226 = scalar_lea.sflag [#allocation7], %s225
          %s227 = sand.u32 %s96, 1
          %s228 = smul.addr %s227, 256
          %s229 = scalar_lea.vmem [#allocation8], %s228
          %s230 = smul.u32 32, %s30
          %s232 = ssub.s32 4096, 4096
          %233 = vsyncadd %s226, %s232
          %s234 = smul.addr %s230, 128
          %s235 = scalar_lea.hbm %s2, %s234
          %s236 = sshll.u32 %s229, 4
          %s237 = int_to_ptr.vmem [resolvable:$true] %s236
          %242 = dma.hbm_to_vmem [thread:$0]  %s235, 4096, %s237, %s226, 128, 128, 8
        $region28: #{tpu_custom_call.1} parent=15 // pred_fallthru
          _
        // Predicated region
        $region29: #{tpu_custom_call.1} parent=15 // pred_check
          %p243 = pneg %p132
        $region30: #{tpu_custom_call.1} parent=15 // pred_check_branch
          %245 = sbr.rel (%p243) target = $region32
        $region31: #{tpu_custom_call.1} parent=15 // pred_region
          %s246 = sand.u32 %s122, 1
          %s247 = scalar_lea.sflag [#allocation10], %s246
          %s248 = sand.u32 %s122, 1
          %s249 = smul.addr %s248, 4
          %s250 = scalar_lea.vmem [#allocation9], %s249
          %s251 = smul.u32 4, %s30
          %s253 = ssub.s32 64, 64
          %254 = vsyncadd %s247, %s253
          %s255 = smul.addr %s251, 16
          %s256 = scalar_lea.hbm %s3, %s255
          %s258 = sshll.u32 %s250, 4
          %s259 = int_to_ptr.vmem [resolvable:$true] %s258
          %261 = dma.hbm_to_vmem [thread:$0]  %s256, 64, %s259, %s247
        $region32: #{tpu_custom_call.1} parent=15 // pred_fallthru
          _
      $region16: #{tpu_custom_call.1} parent=5 // pred_fallthru
        _
      %p262 = scmp.le.s32.totalorder 1, %s22
      %p263 = scmp.lt.s32.totalorder %s22, 5
      %p264 = pnand %p262, %p263
      %p265 = pneg %p264
      // Predicated region
      $region33: #{tpu_custom_call.1} parent=5 // pred_check
        _
      $region34: #{tpu_custom_call.1} parent=5 // pred_check_branch
        %267 = sbr.rel (%p264) target = $region36
      $region35: #{tpu_custom_call.1} parent=5 // pred_region
        %s268 = ssub.s32 %s22, 1
        %s269 = sand.u32 %s47, 1
        %s270 = scalar_lea.sflag [#allocation4], %s269
        %s271 = sand.u32 %s47, 1
        %s272 = smul.addr %s271, 8
        %s273 = scalar_lea.vmem [#allocation3], %s272
        // Predicated region
        $region37: #{tpu_custom_call.1} parent=35 // pred_check
          %p274 = pneg %p60
        $region38: #{tpu_custom_call.1} parent=35 // pred_check_branch
          %276 = sbr.rel (%p274) target = $region40
        $region39: #{tpu_custom_call.1} parent=35 // pred_region
          %277 = dma.done %s270, 128
        $region40: #{tpu_custom_call.1} parent=35 // pred_fallthru
          _
        %s278 = sand.u32 %s27, 1
        %s279 = scalar_lea.sflag [#allocation7], %s278
        %s280 = sand.u32 %s73, 1
        %s281 = smul.addr %s280, 512
        %s282 = scalar_lea.vmem [#allocation6], %s281
        // Predicated region
        $region41: #{tpu_custom_call.1} parent=35 // pred_check
          %p283 = pneg %p86
        $region42: #{tpu_custom_call.1} parent=35 // pred_check_branch
          %285 = sbr.rel (%p283) target = $region44
        $region43: #{tpu_custom_call.1} parent=35 // pred_region
          %286 = dma.done %s279, 8192
        $region44: #{tpu_custom_call.1} parent=35 // pred_fallthru
          _
        %s287 = sand.u32 %s27, 1
        %s288 = scalar_lea.sflag [#allocation7], %s287
        %s289 = sand.u32 %s99, 1
        %s290 = smul.addr %s289, 256
        %s291 = scalar_lea.vmem [#allocation8], %s290
        // Predicated region
        $region45: #{tpu_custom_call.1} parent=35 // pred_check
          %p292 = pneg %p112
        $region46: #{tpu_custom_call.1} parent=35 // pred_check_branch
          %294 = sbr.rel (%p292) target = $region48
        $region47: #{tpu_custom_call.1} parent=35 // pred_region
          %295 = dma.done %s288, 4096
        $region48: #{tpu_custom_call.1} parent=35 // pred_fallthru
          _
        %s296 = sand.u32 %s125, 1
        %s297 = scalar_lea.sflag [#allocation10], %s296
        %s298 = sand.u32 %s125, 1
        %s299 = smul.addr %s298, 4
        %s300 = scalar_lea.vmem [#allocation9], %s299
        // Predicated region
        $region49: #{tpu_custom_call.1} parent=35 // pred_check
          %p301 = pneg %p138
        $region50: #{tpu_custom_call.1} parent=35 // pred_check_branch
          %303 = sbr.rel (%p301) target = $region52
        $region51: #{tpu_custom_call.1} parent=35 // pred_region
          %304 = dma.done %s297, 64
        $region52: #{tpu_custom_call.1} parent=35 // pred_fallthru
          _
        %s305 = sand.u32 %s47, 1
        %s306 = scalar_lea.sflag [#allocation4], %s305
        %s307 = sand.u32 %s47, 1
        %s308 = smul.addr %s307, 8
        %s309 = scalar_lea.vmem [#allocation3], %s308
        %p310 = pneg %p60
        %p311 = pneg %p57
        %s312 = sand.u32 %s27, 1
        %s313 = scalar_lea.sflag [#allocation7], %s312
        %s314 = sand.u32 %s73, 1
        %s315 = smul.addr %s314, 512
        %s316 = scalar_lea.vmem [#allocation6], %s315
        %p317 = pneg %p86
        %p318 = pneg %p83
        %s319 = sand.u32 %s27, 1
        %s320 = scalar_lea.sflag [#allocation7], %s319
        %s321 = sand.u32 %s99, 1
        %s322 = smul.addr %s321, 256
        %s323 = scalar_lea.vmem [#allocation8], %s322
        %p324 = pneg %p112
        %p325 = pneg %p109
        %s326 = sand.u32 %s125, 1
        %s327 = scalar_lea.sflag [#allocation10], %s326
        %s328 = sand.u32 %s125, 1
        %s329 = smul.addr %s328, 4
        %s330 = scalar_lea.vmem [#allocation9], %s329
        %p331 = pneg %p138
        %p332 = pneg %p135
        %p333 = pneg %p164
        %p334 = pneg %p161
        %s335 = sand.u32 %s151, 1
        %s336 = scalar_lea.sflag [#allocation5], %s335
        %s337 = sand.u32 %s151, 1
        %s338 = smul.addr %s337, 8
        %s339 = scalar_lea.vmem [#allocation11], %s338
        %s340 = smul.u32 4, %s32
        %s341 = smul.u32 32, %s32
        %s342 = smul.u32 4, %s32
        %p343 = scmp.eq.s32.totalorder %s32, 0
        %p344 = scmp.eq.s32.totalorder %s32, 1
        %v345 = vld [vmem:[%s273] sm:$0xff]
        %v346 = vld [vmem:[%s282] sm:$0xff]
        %v347 = vld [vmem:[%s282 + $0x8] sm:$0xff]
        %v348 = vld [vmem:[%s282 + $0x10] sm:$0xff]
        %v349 = vld [vmem:[%s282 + $0x18] sm:$0xff]
        %v350 = vld [vmem:[%s282 + $0x20] sm:$0xff]
        %v351 = vld [vmem:[%s282 + $0x28] sm:$0xff]
        %v352 = vld [vmem:[%s282 + $0x30] sm:$0xff]
        %v353 = vld [vmem:[%s282 + $0x38] sm:$0xff]
        %v354 = vld [vmem:[%s282 + $0x40] sm:$0xff]
        %v355 = vld [vmem:[%s282 + $0x48] sm:$0xff]
        %v356 = vld [vmem:[%s282 + $0x50] sm:$0xff]
        %v357 = vld [vmem:[%s282 + $0x58] sm:$0xff]
        %v358 = vld [vmem:[%s282 + $0x60] sm:$0xff]
        %v359 = vld [vmem:[%s282 + $0x68] sm:$0xff]
        %v360 = vld [vmem:[%s282 + $0x70] sm:$0xff]
        %v361 = vld [vmem:[%s282 + $0x78] sm:$0xff]
        %v362 = vld [vmem:[%s282 + $0x80] sm:$0xff]
        %v363 = vld [vmem:[%s282 + $0x88] sm:$0xff]
        %v364 = vld [vmem:[%s282 + $0x90] sm:$0xff]
        %v365 = vld [vmem:[%s282 + $0x98] sm:$0xff]
        %v366 = vld [vmem:[%s282 + $0xa0] sm:$0xff]
        %v367 = vld [vmem:[%s282 + $0xa8] sm:$0xff]
        %v368 = vld [vmem:[%s282 + $0xb0] sm:$0xff]
        %v369 = vld [vmem:[%s282 + $0xb8] sm:$0xff]
        %v370 = vld [vmem:[%s282 + $0xc0] sm:$0xff]
        %v371 = vld [vmem:[%s282 + $0xc8] sm:$0xff]
        %v372 = vld [vmem:[%s282 + $0xd0] sm:$0xff]
        %v373 = vld [vmem:[%s282 + $0xd8] sm:$0xff]
        %v374 = vld [vmem:[%s282 + $0xe0] sm:$0xff]
        %v375 = vld [vmem:[%s282 + $0xe8] sm:$0xff]
        %v376 = vld [vmem:[%s282 + $0xf0] sm:$0xff]
        %v377 = vld [vmem:[%s282 + $0xf8] sm:$0xff]
        %v378 = vld [vmem:[%s282 + $0x100] sm:$0xff]
        %v379 = vld [vmem:[%s282 + $0x108] sm:$0xff]
        %v380 = vld [vmem:[%s282 + $0x110] sm:$0xff]
        %v381 = vld [vmem:[%s282 + $0x118] sm:$0xff]
        %v382 = vld [vmem:[%s282 + $0x120] sm:$0xff]
        %v383 = vld [vmem:[%s282 + $0x128] sm:$0xff]
        %v384 = vld [vmem:[%s282 + $0x130] sm:$0xff]
        %v385 = vld [vmem:[%s282 + $0x138] sm:$0xff]
        %v386 = vld [vmem:[%s282 + $0x140] sm:$0xff]
        %v387 = vld [vmem:[%s282 + $0x148] sm:$0xff]
        %v388 = vld [vmem:[%s282 + $0x150] sm:$0xff]
        %v389 = vld [vmem:[%s282 + $0x158] sm:$0xff]
        %v390 = vld [vmem:[%s282 + $0x160] sm:$0xff]
        %v391 = vld [vmem:[%s282 + $0x168] sm:$0xff]
        %v392 = vld [vmem:[%s282 + $0x170] sm:$0xff]
        %v393 = vld [vmem:[%s282 + $0x178] sm:$0xff]
        %v394 = vld [vmem:[%s282 + $0x180] sm:$0xff]
        %v395 = vld [vmem:[%s282 + $0x188] sm:$0xff]
        %v396 = vld [vmem:[%s282 + $0x190] sm:$0xff]
        %v397 = vld [vmem:[%s282 + $0x198] sm:$0xff]
        %v398 = vld [vmem:[%s282 + $0x1a0] sm:$0xff]
        %v399 = vld [vmem:[%s282 + $0x1a8] sm:$0xff]
        %v400 = vld [vmem:[%s282 + $0x1b0] sm:$0xff]
        %v401 = vld [vmem:[%s282 + $0x1b8] sm:$0xff]
        %v402 = vld [vmem:[%s282 + $0x1c0] sm:$0xff]
        %v403 = vld [vmem:[%s282 + $0x1c8] sm:$0xff]
        %v404 = vld [vmem:[%s282 + $0x1d0] sm:$0xff]
        %v405 = vld [vmem:[%s282 + $0x1d8] sm:$0xff]
        %v406 = vld [vmem:[%s282 + $0x1e0] sm:$0xff]
        %v407 = vld [vmem:[%s282 + $0x1e8] sm:$0xff]
        %v408 = vld [vmem:[%s282 + $0x1f0] sm:$0xff]
        %v409 = vld [vmem:[%s282 + $0x1f8] sm:$0xff]
        %410 = vmatprep.subr.mxu0 %v407
        %411 = vmatpush1.msra.mxu0 %v406
        %412 = vmatprep.subr.mxu0 %v403
        %413 = vmatpush1.msra.mxu0 %v402
        %414 = vmatprep.subr.mxu0 %v399
        %415 = vmatpush1.msra.mxu0 %v398
        %416 = vmatprep.subr.mxu0 %v395
        %417 = vmatpush1.msra.mxu0 %v394
        %418 = vmatprep.subr.mxu0 %v391
        %419 = vmatpush1.msra.mxu0 %v390
        %420 = vmatprep.subr.mxu0 %v387
        %421 = vmatpush1.msra.mxu0 %v386
        %422 = vmatprep.subr.mxu0 %v383
        %423 = vmatpush1.msra.mxu0 %v382
        %424 = vmatprep.subr.mxu0 %v379
        %425 = vmatpush1.msra.mxu0 %v378
        %426 = vmatprep.subr.mxu0 %v375
        %427 = vmatpush1.msra.mxu0 %v374
        %428 = vmatprep.subr.mxu0 %v371
        %429 = vmatpush1.msra.mxu0 %v370
        %430 = vmatprep.subr.mxu0 %v367
        %431 = vmatpush1.msra.mxu0 %v366
        %432 = vmatprep.subr.mxu0 %v363
        %433 = vmatpush1.msra.mxu0 %v362
        %434 = vmatprep.subr.mxu0 %v359
        %435 = vmatpush1.msra.mxu0 %v358
        %436 = vmatprep.subr.mxu0 %v355
        %437 = vmatpush1.msra.mxu0 %v354
        %438 = vmatprep.subr.mxu0 %v351
        %439 = vmatpush1.msra.mxu0 %v350
        %440 = vmatprep.subr.mxu0 %v347
        %441 = vmatpush1.msra.mxu0 %v346
        %442 = vmatprep.subr.mxu0 0.0
        %443 = vmatpush2.msra.mxu0 0.0
        %444 = vmatprep.subr.mxu0 0.0
        %445 = vmatpush2.msra.mxu0 0.0
        %446 = vmatprep.subr.mxu0 0.0
        %447 = vmatpush2.msra.mxu0 0.0
        %448 = vmatprep.subr.mxu0 0.0
        %449 = vmatpush2.msra.mxu0 0.0
        %450 = vmatprep.subr.mxu0 0.0
        %451 = vmatpush2.msra.mxu0 0.0
        %452 = vmatprep.subr.mxu0 0.0
        %453 = vmatpush2.msra.mxu0 0.0
        %454 = vmatprep.subr.mxu0 0.0
        %455 = vmatpush2.msra.mxu0 0.0
        %456 = vmatprep.subr.mxu0 0.0
        %457 = vmatpush2.msra.mxu0 0.0
        %458 = vmatprep.subr.mxu0 0.0
        %459 = vmatpush2.msra.mxu0 0.0
        %460 = vmatprep.subr.mxu0 0.0
        %461 = vmatpush2.msra.mxu0 0.0
        %462 = vmatprep.subr.mxu0 0.0
        %463 = vmatpush2.msra.mxu0 0.0
        %464 = vmatprep.subr.mxu0 0.0
        %465 = vmatpush2.msra.mxu0 0.0
        %466 = vmatprep.subr.mxu0 0.0
        %467 = vmatpush2.msra.mxu0 0.0
        %468 = vmatprep.subr.mxu0 0.0
        %469 = vmatpush2.msra.mxu0 0.0
        %470 = vmatprep.subr.mxu0 0.0
        %471 = vmatpush2.msra.mxu0 0.0
        %472 = vmatprep.subr.mxu0 0.0
        %473 = vmatpush2.msra.mxu0 0.0
        %474 = vmatprep.mubr.f32.mxu0 0.0
        %475 = vmatmul.mubr.f32.gmra.mxu0 %v345
        %v476 = vpop.f32.mrf.mxu0
        %v477 = vadd.f32 0.0, %v476
        %v478 = vpop.f32.mrf.mxu0
        %v479 = vadd.f32 0.0, %v478
        %480 = vdwg.mxu0
        %481 = vmatprep.subr.mxu0 %v409
        %482 = vmatpush1.msra.mxu0 %v408
        %483 = vmatprep.subr.mxu0 %v405
        %484 = vmatpush1.msra.mxu0 %v404
        %485 = vmatprep.subr.mxu0 %v401
        %486 = vmatpush1.msra.mxu0 %v400
        %487 = vmatprep.subr.mxu0 %v397
        %488 = vmatpush1.msra.mxu0 %v396
        %489 = vmatprep.subr.mxu0 %v393
        %490 = vmatpush1.msra.mxu0 %v392
        %491 = vmatprep.subr.mxu0 %v389
        %492 = vmatpush1.msra.mxu0 %v388
        %493 = vmatprep.subr.mxu0 %v385
        %494 = vmatpush1.msra.mxu0 %v384
        %495 = vmatprep.subr.mxu0 %v381
        %496 = vmatpush1.msra.mxu0 %v380
        %497 = vmatprep.subr.mxu0 %v377
        %498 = vmatpush1.msra.mxu0 %v376
        %499 = vmatprep.subr.mxu0 %v373
        %500 = vmatpush1.msra.mxu0 %v372
        %501 = vmatprep.subr.mxu0 %v369
        %502 = vmatpush1.msra.mxu0 %v368
        %503 = vmatprep.subr.mxu0 %v365
        %504 = vmatpush1.msra.mxu0 %v364
        %505 = vmatprep.subr.mxu0 %v361
        %506 = vmatpush1.msra.mxu0 %v360
        %507 = vmatprep.subr.mxu0 %v357
        %508 = vmatpush1.msra.mxu0 %v356
        %509 = vmatprep.subr.mxu0 %v353
        %510 = vmatpush1.msra.mxu0 %v352
        %511 = vmatprep.subr.mxu0 %v349
        %512 = vmatpush1.msra.mxu0 %v348
        %513 = vmatprep.subr.mxu0 0.0
        %514 = vmatpush2.msra.mxu0 0.0
        %515 = vmatprep.subr.mxu0 0.0
        %516 = vmatpush2.msra.mxu0 0.0
        %517 = vmatprep.subr.mxu0 0.0
        %518 = vmatpush2.msra.mxu0 0.0
        %519 = vmatprep.subr.mxu0 0.0
        %520 = vmatpush2.msra.mxu0 0.0
        %521 = vmatprep.subr.mxu0 0.0
        %522 = vmatpush2.msra.mxu0 0.0
        %523 = vmatprep.subr.mxu0 0.0
        %524 = vmatpush2.msra.mxu0 0.0
        %525 = vmatprep.subr.mxu0 0.0
        %526 = vmatpush2.msra.mxu0 0.0
        %527 = vmatprep.subr.mxu0 0.0
        %528 = vmatpush2.msra.mxu0 0.0
        %529 = vmatprep.subr.mxu0 0.0
        %530 = vmatpush2.msra.mxu0 0.0
        %531 = vmatprep.subr.mxu0 0.0
        %532 = vmatpush2.msra.mxu0 0.0
        %533 = vmatprep.subr.mxu0 0.0
        %534 = vmatpush2.msra.mxu0 0.0
        %535 = vmatprep.subr.mxu0 0.0
        %536 = vmatpush2.msra.mxu0 0.0
        %537 = vmatprep.subr.mxu0 0.0
        %538 = vmatpush2.msra.mxu0 0.0
        %539 = vmatprep.subr.mxu0 0.0
        %540 = vmatpush2.msra.mxu0 0.0
        %541 = vmatprep.subr.mxu0 0.0
        %542 = vmatpush2.msra.mxu0 0.0
        %543 = vmatprep.subr.mxu0 0.0
        %544 = vmatpush2.msra.mxu0 0.0
        %545 = vmatprep.mubr.f32.mxu0 0.0
        %546 = vmatmul.mubr.f32.gmra.mxu0 %v345
        %v547 = vpop.f32.mrf.mxu0
        %v548 = vadd.f32 0.0, %v547
        %v549 = vpop.f32.mrf.mxu0
        %v550 = vadd.f32 0.0, %v549
        %551 = vdwg.mxu0
        %v552 = vld [vmem:[%s300] sm:$0xf]
        %v554 = vlaneseq
        %v555 = vshrl.u32 %v554, 7
        %v556 = vsub.s32 0, %v555
        %v557 = vrot.slane %v552, %v556
        %v558 = vlaneseq
        %v559 = vshrl.u32 %v558, 7
        %v560 = vsub.s32 1, %v559
        %v561 = vrot.slane %v552, %v560
        %v562 = vlaneseq
        %v563 = vshrl.u32 %v562, 7
        %v564 = vsub.s32 2, %v563
        %v565 = vrot.slane %v552, %v564
        %v566 = vlaneseq
        %v567 = vshrl.u32 %v566, 7
        %v568 = vsub.s32 3, %v567
        %v569 = vrot.slane %v552, %v568
        %v574 = vmul.f32 %v477, %v557
        %v575 = vmul.f32 %v479, %v561
        %v576 = vmul.f32 %v548, %v565
        %v577 = vmul.f32 %v550, %v569
        %v578 = vxor.u32 %v576, 2147483648
        %v579 = vxor.u32 %v577, 2147483648
        %v580 = vmul.f32 %v578, 1.442695
        %v581 = vpow.pop %v580
        %v582 = vmul.f32 %v579, 1.442695
        %v583 = vpow.pop %v582
        %v584 = vadd.f32 %v581, 1.0
        %v585 = vadd.f32 %v583, 1.0
        %v586 = vrcp.pop %v584
        %v587 = vmul.f32 1.0, %v586
        %v588 = vrcp.pop %v585
        %v589 = vmul.f32 1.0, %v588
        %v590 = vmul.f32 %v576, %v587
        %v591 = vmul.f32 %v577, %v589
        %v592 = vmul.f32 %v574, %v590
        %v593 = vmul.f32 %v575, %v591
        %v594 = vld [vmem:[%s291] sm:$0xff]
        %v595 = vld [vmem:[%s291 + $0x8] sm:$0xff]
        %v596 = vld [vmem:[%s291 + $0x10] sm:$0xff]
        %v597 = vld [vmem:[%s291 + $0x18] sm:$0xff]
        %v598 = vld [vmem:[%s291 + $0x20] sm:$0xff]
        %v599 = vld [vmem:[%s291 + $0x28] sm:$0xff]
        %v600 = vld [vmem:[%s291 + $0x30] sm:$0xff]
        %v601 = vld [vmem:[%s291 + $0x38] sm:$0xff]
        %v602 = vld [vmem:[%s291 + $0x40] sm:$0xff]
        %v603 = vld [vmem:[%s291 + $0x48] sm:$0xff]
        %v604 = vld [vmem:[%s291 + $0x50] sm:$0xff]
        %v605 = vld [vmem:[%s291 + $0x58] sm:$0xff]
        %v606 = vld [vmem:[%s291 + $0x60] sm:$0xff]
        %v607 = vld [vmem:[%s291 + $0x68] sm:$0xff]
        %v608 = vld [vmem:[%s291 + $0x70] sm:$0xff]
        %v609 = vld [vmem:[%s291 + $0x78] sm:$0xff]
        %v610 = vld [vmem:[%s291 + $0x80] sm:$0xff]
        %v611 = vld [vmem:[%s291 + $0x88] sm:$0xff]
        %v612 = vld [vmem:[%s291 + $0x90] sm:$0xff]
        %v613 = vld [vmem:[%s291 + $0x98] sm:$0xff]
        %v614 = vld [vmem:[%s291 + $0xa0] sm:$0xff]
        %v615 = vld [vmem:[%s291 + $0xa8] sm:$0xff]
        %v616 = vld [vmem:[%s291 + $0xb0] sm:$0xff]
        %v617 = vld [vmem:[%s291 + $0xb8] sm:$0xff]
        %v618 = vld [vmem:[%s291 + $0xc0] sm:$0xff]
        %v619 = vld [vmem:[%s291 + $0xc8] sm:$0xff]
        %v620 = vld [vmem:[%s291 + $0xd0] sm:$0xff]
        %v621 = vld [vmem:[%s291 + $0xd8] sm:$0xff]
        %v622 = vld [vmem:[%s291 + $0xe0] sm:$0xff]
        %v623 = vld [vmem:[%s291 + $0xe8] sm:$0xff]
        %v624 = vld [vmem:[%s291 + $0xf0] sm:$0xff]
        %v625 = vld [vmem:[%s291 + $0xf8] sm:$0xff]
        %626 = vmatprep.subr.mxu0 0.0
        %627 = vmatpush1.msra.mxu0 %v609
        %628 = vmatprep.subr.mxu0 0.0
        %629 = vmatpush1.msra.mxu0 %v608
        %630 = vmatprep.subr.mxu0 0.0
        %631 = vmatpush1.msra.mxu0 %v607
        %632 = vmatprep.subr.mxu0 0.0
        %633 = vmatpush1.msra.mxu0 %v606
        %634 = vmatprep.subr.mxu0 0.0
        %635 = vmatpush1.msra.mxu0 %v605
        %636 = vmatprep.subr.mxu0 0.0
        %637 = vmatpush1.msra.mxu0 %v604
        %638 = vmatprep.subr.mxu0 0.0
        %639 = vmatpush1.msra.mxu0 %v603
        %640 = vmatprep.subr.mxu0 0.0
        %641 = vmatpush1.msra.mxu0 %v602
        %642 = vmatprep.subr.mxu0 0.0
        %643 = vmatpush1.msra.mxu0 %v601
        %644 = vmatprep.subr.mxu0 0.0
        %645 = vmatpush1.msra.mxu0 %v600
        %646 = vmatprep.subr.mxu0 0.0
        %647 = vmatpush1.msra.mxu0 %v599
        %648 = vmatprep.subr.mxu0 0.0
        %649 = vmatpush1.msra.mxu0 %v598
        %650 = vmatprep.subr.mxu0 0.0
        %651 = vmatpush1.msra.mxu0 %v597
        %652 = vmatprep.subr.mxu0 0.0
        %653 = vmatpush1.msra.mxu0 %v596
        %654 = vmatprep.subr.mxu0 0.0
        %655 = vmatpush1.msra.mxu0 %v595
        %656 = vmatprep.subr.mxu0 0.0
        %657 = vmatpush1.msra.mxu0 %v594
        %658 = vmatprep.subr.mxu0 0.0
        %659 = vmatpush2.msra.mxu0 %v625
        %660 = vmatprep.subr.mxu0 0.0
        %661 = vmatpush2.msra.mxu0 %v624
        %662 = vmatprep.subr.mxu0 0.0
        %663 = vmatpush2.msra.mxu0 %v623
        %664 = vmatprep.subr.mxu0 0.0
        %665 = vmatpush2.msra.mxu0 %v622
        %666 = vmatprep.subr.mxu0 0.0
        %667 = vmatpush2.msra.mxu0 %v621
        %668 = vmatprep.subr.mxu0 0.0
        %669 = vmatpush2.msra.mxu0 %v620
        %670 = vmatprep.subr.mxu0 0.0
        %671 = vmatpush2.msra.mxu0 %v619
        %672 = vmatprep.subr.mxu0 0.0
        %673 = vmatpush2.msra.mxu0 %v618
        %674 = vmatprep.subr.mxu0 0.0
        %675 = vmatpush2.msra.mxu0 %v617
        %676 = vmatprep.subr.mxu0 0.0
        %677 = vmatpush2.msra.mxu0 %v616
        %678 = vmatprep.subr.mxu0 0.0
        %679 = vmatpush2.msra.mxu0 %v615
        %680 = vmatprep.subr.mxu0 0.0
        %681 = vmatpush2.msra.mxu0 %v614
        %682 = vmatprep.subr.mxu0 0.0
        %683 = vmatpush2.msra.mxu0 %v613
        %684 = vmatprep.subr.mxu0 0.0
        %685 = vmatpush2.msra.mxu0 %v612
        %686 = vmatprep.subr.mxu0 0.0
        %687 = vmatpush2.msra.mxu0 %v611
        %688 = vmatprep.subr.mxu0 0.0
        %689 = vmatpush2.msra.mxu0 %v610
        %690 = vmatprep.mubr.f32.mxu0 %v593
        %691 = vmatmul.mubr.f32.gmra.mxu0 %v592
        %v692 = vpop.f32.mrf.mxu0
        %v693 = vadd.f32 0.0, %v692
        %v694 = vpop.f32.mrf.mxu0
        %695 = vdwg.mxu0
        %p696 = scmp.ne.s32.totalorder %s32, 1
        %p697 = pnand %p343, %p696
        %p698 = pneg %p697
        // Predicated region
        $region53: #{tpu_custom_call.1} parent=35 // pred_check
          _
        $region54: #{tpu_custom_call.1} parent=35 // pred_check_branch
          %700 = sbr.rel (%p697) target = $region56
        $region55: #{tpu_custom_call.1} parent=35 // pred_region
          %701 = vst [vmem:[#allocation2] sm:$0xff] %v693
        $region56: #{tpu_custom_call.1} parent=35 // pred_fallthru
          _
        %p702 = scmp.ne.s32.totalorder %s32, 0
        %p703 = pnand %p702, %p696
        %p704 = pneg %p703
        // Predicated region
        $region57: #{tpu_custom_call.1} parent=35 // pred_check
          _
        $region58: #{tpu_custom_call.1} parent=35 // pred_check_branch
          %706 = sbr.rel (%p703) target = $region60
        $region59: #{tpu_custom_call.1} parent=35 // pred_region
          %v707 = vld [vmem:[#allocation2] sm:$0xff]
          %v708 = vadd.f32 %v707, %v693
          %709 = vst [vmem:[#allocation2] sm:$0xff] %v708
        $region60: #{tpu_custom_call.1} parent=35 // pred_fallthru
          _
        %p710 = pnand %p343, %p344
        %p711 = pneg %p710
        // Predicated region
        $region61: #{tpu_custom_call.1} parent=35 // pred_check
          _
        $region62: #{tpu_custom_call.1} parent=35 // pred_check_branch
          %713 = sbr.rel (%p710) target = $region64
        $region63: #{tpu_custom_call.1} parent=35 // pred_region
          %714 = vst [vmem:[%s339] sm:$0xff] %v693
        $region64: #{tpu_custom_call.1} parent=35 // pred_fallthru
          _
        %p715 = pnand %p702, %p344
        %p716 = pneg %p715
        // Predicated region
        $region65: #{tpu_custom_call.1} parent=35 // pred_check
          _
        $region66: #{tpu_custom_call.1} parent=35 // pred_check_branch
          %718 = sbr.rel (%p715) target = $region68
        $region67: #{tpu_custom_call.1} parent=35 // pred_region
          %v719 = vld [vmem:[#allocation2] sm:$0xff]
          %v720 = vadd.f32 %v719, %v693
          %721 = vst [vmem:[%s339] sm:$0xff] %v720
        $region68: #{tpu_custom_call.1} parent=35 // pred_fallthru
          _
        %s722 = sand.u32 %s151, 1
        %s723 = scalar_lea.sflag [#allocation5], %s722
        %s724 = sand.u32 %s151, 1
        %s725 = smul.addr %s724, 8
        %s726 = scalar_lea.vmem [#allocation11], %s725
        // Predicated region
        $region69: #{tpu_custom_call.1} parent=35 // pred_check
          %p727 = pneg %p161
        $region70: #{tpu_custom_call.1} parent=35 // pred_check_branch
          %729 = sbr.rel (%p727) target = $region72
        $region71: #{tpu_custom_call.1} parent=35 // pred_region
          %s731 = ssub.s32 128, 128
          %732 = vsyncadd %s723, %s731
          %s733 = smul.addr %s31, 128
          %s734 = scalar_lea.hbm %s4, %s733
          %s736 = sshll.u32 %s726, 4
          %s737 = int_to_ptr.vmem [resolvable:$true] %s736
          %739 = dma.vmem_to_hbm [thread:$0]  %s737, 128, %s734, %s723
        $region72: #{tpu_custom_call.1} parent=35 // pred_fallthru
          _
      $region36: #{tpu_custom_call.1} parent=5 // pred_fallthru
        _
      %p740 = scmp.le.s32.totalorder 2, %s22
      // Predicated region
      $region73: #{tpu_custom_call.1} parent=5 // pred_check
        %p741 = pneg %p740
      $region74: #{tpu_custom_call.1} parent=5 // pred_check_branch
        %743 = sbr.rel (%p741) target = $region76
      $region75: #{tpu_custom_call.1} parent=5 // pred_region
        %s744 = ssub.s32 %s22, 2
        // Predicated region
        $region77: #{tpu_custom_call.1} parent=75 // pred_check
          %p745 = pneg %p167
        $region78: #{tpu_custom_call.1} parent=75 // pred_check_branch
          %747 = sbr.rel (%p745) target = $region80
        $region79: #{tpu_custom_call.1} parent=75 // pred_region
          %s748 = sand.u32 %s152, 1
          %s749 = scalar_lea.sflag [#allocation5], %s748
          %s750 = sand.u32 %s152, 1
          %s751 = smul.addr %s750, 8
          %s752 = scalar_lea.vmem [#allocation11], %s751
          %753 = dma.done %s749, 128
        $region80: #{tpu_custom_call.1} parent=75 // pred_fallthru
          _
      $region76: #{tpu_custom_call.1} parent=5 // pred_fallthru
        _
    $region6: #{tpu_custom_call.1} parent=1 // loop_footer
      %s26 = sadd.s32 1, %s22
    $region7: #{tpu_custom_call.1} parent=1 // loop_footer_branch
      %21 = sbr.rel target = $region3
    $region8: #{tpu_custom_call.1} parent=1 // loop_exit
      _
    %754 = vsyncpa [#allocation4], 1
    %s755 = scalar_lea.sflag [#allocation4], 1
    %756 = vsyncpa %s755, 1
    %757 = vsyncpa [#allocation7], 1
    %s758 = scalar_lea.sflag [#allocation7], 1
    %759 = vsyncpa %s758, 1
    %760 = vsyncpa [#allocation10], 1
    %s761 = scalar_lea.sflag [#allocation10], 1
    %762 = vsyncpa %s761, 1
    %763 = vsyncpa [#allocation5], 1
    %s764 = scalar_lea.sflag [#allocation5], 1
    %765 = vsyncpa %s764, 1

</llo_original>
